<compile_context>
chip_gen: v7x
topology: tpu7x:2x2x1
jax: 0.10.0
libtpu: 0.0.40
codegen_flags: <defaults>
</compile_context>

<pallas_src>
import functools
import math

import jax
import jax.numpy as jnp
import numpy as np
from jax.experimental import pallas as pl
from jax.experimental.pallas import tpu as pltpu


def _eca_kernel(w_ref, x_ref, o_ref, pp_ref, *, k, pad, lead):
    # w_ref : (k,)  f32 in SMEM (scalar prefetch) -- conv taps pre-scaled by 1/HW
    # x_ref : (Bt, C, HWp) native-dtype input block (spatial axis zero-padded)
    # o_ref : (Bt, C, HWp) output block, same dtype as input
    # pp_ref: (Bt, lead + C + pad, 1) f32 VMEM scratch -- zero-padded pooled vector
    bt, c, _ = x_ref.shape

    x = x_ref[...]
    # f32 accumulation for the pool regardless of input dtype (no full f32 copy of x).
    pool = jnp.sum(x, axis=-1, keepdims=True, dtype=jnp.float32)   # (Bt, C, 1)

    pp_ref[...] = jnp.zeros_like(pp_ref)             # zero the pad/guard region
    pp_ref[:, lead:lead + c, :] = pool               # sublane-aligned store (lead % 8 == 0)

    base = lead - pad                                # tap t reads pool[i + t - pad]
    y = w_ref[0] * pp_ref[:, base:base + c, :]
    for t in range(1, k):                            # k is tiny (1/3/5): VPU shifted adds
        y = y + w_ref[t] * pp_ref[:, base + t:base + t + c, :]

    s = jax.nn.sigmoid(y)                            # (Bt, C, 1) f32, sigmoid on EUP
    # Channel scale broadcasts along the lane (spatial) axis; multiply in native dtype
    # so low-precision inputs never materialize a full f32 copy of the block.
    o_ref[...] = (x * s.astype(x.dtype)).astype(o_ref.dtype)


def eca_block_forward(x_nchw, conv_weight, *, block_bytes_target=2 * 1024 * 1024):
    """x_nchw: (B, C, H, W) any float dtype; conv_weight: (k,) Conv1d taps."""
    B, C, H, W = x_nchw.shape
    HW = H * W
    k = int(conv_weight.shape[0])
    pad = k // 2

    # Lane-dense layout: pad the flattened spatial axis up to a multiple of 128.
    HWp = ((HW + 127) // 128) * 128
    x = x_nchw.reshape(B, C, HW)                     # native dtype; no f32 copy in HBM
    if HWp != HW:
        x = jnp.pad(x, ((0, 0), (0, 0), (0, HWp - HW)))

    # Fold the average-pool 1/HW into the taps (kernel uses a plain sum).
    w_scaled = conv_weight.astype(jnp.float32) / float(HW)

    # Batch tiling: biggest block within ~block_bytes_target, evenly dividing B.
    # (One batch element's (C, HWp) slab must fit in VMEM -- always true for ECA-scale
    #  feature maps; e.g. C=512, 7x7 -> ~0.26 MiB.)
    per_batch = C * HWp * x.dtype.itemsize
    bt = max(1, min(B, block_bytes_target // max(per_batch, 1)))
    while B % bt:
        bt -= 1
    grid = (B // bt,)

    # Sublane-aligned guard region to the left of the padded pooled vector so the
    # in-kernel store lands on a multiple-of-8 sublane offset.
    lead = 0 if pad == 0 else ((pad + 7) // 8) * 8

    kernel = functools.partial(_eca_kernel, k=k, pad=pad, lead=lead)
    out = pl.pallas_call(
        kernel,
        out_shape=jax.ShapeDtypeStruct((B, C, HWp), x.dtype),
        grid_spec=pltpu.PrefetchScalarGridSpec(
            num_scalar_prefetch=1,                   # conv taps -> SMEM
            grid=grid,
            in_specs=[pl.BlockSpec((bt, C, HWp), lambda b, w: (b, 0, 0))],
            out_specs=pl.BlockSpec((bt, C, HWp), lambda b, w: (b, 0, 0)),
            scratch_shapes=[pltpu.VMEM((bt, lead + C + pad, 1), jnp.float32)],
        ),
        compiler_params=pltpu.CompilerParams(
            dimension_semantics=("parallel",)),
    )(w_scaled, x)

    if HWp != HW:
        out = out[:, :, :HW]
    return out.reshape(B, C, H, W)


def _reference(x_nchw, conv_weight):
    """Pure-JAX reference matching the PyTorch module."""
    B, C, H, W = x_nchw.shape
    k = conv_weight.shape[0]
    pad = k // 2
    pool = jnp.mean(x_nchw.astype(jnp.float32), axis=(2, 3))     # (B, C)
    pool_p = jnp.pad(pool, ((0, 0), (pad, pad)))                 # Conv1d zero padding
    y = jnp.zeros((B, C), jnp.float32)
    for t in range(k):
        y = y + conv_weight[t] * pool_p[:, t:t + C]
    s = jax.nn.sigmoid(y)[:, :, None, None]
    return (s * x_nchw.astype(jnp.float32)).astype(x_nchw.dtype)


if __name__ == "__main__":
    # B=2, C=32, H=W=8  (C=32 -> kernel_size = int(|(log2(32)+1)/2|) = 3, odd)
    B, C, H, W = 2, 32, 8, 8

    # Replicate the module's __init__ kernel-size computation.
    b_hp, gama = 1, 2
    kernel_size = int(abs((math.log(C, 2) + b_hp) / gama))
    # (the module's even/odd branch is a no-op; keep as-is)
    assert kernel_size % 2 == 1, "pick C so the conv kernel size is odd (as ECA intends)"

    key = jax.random.PRNGKey(0)
    kx, kw = jax.random.split(key)
    x = jax.random.normal(kx, (B, C, H, W), dtype=jnp.float32)

    # Deterministic Kaiming-normal-style init for Conv1d weight (1, 1, k): std = sqrt(2/fan_in)
    fan_in = 1 * kernel_size
    conv_w = (jax.random.normal(kw, (kernel_size,), dtype=jnp.float32)
              * jnp.sqrt(2.0 / fan_in))

    out = eca_block_forward(x, conv_w)
    out = jax.block_until_ready(out)

    ref = _reference(x, conv_w)
    np.testing.assert_allclose(np.asarray(out), np.asarray(ref), rtol=1e-5, atol=1e-5)

    print("KERNEL_OK")
</pallas_src>

<mosaic_0001>
module attributes {stable_mosaic.version = 11 : i64} {
  func.func @_eca_kernel(%arg0: i32, %arg1: memref<3xf32, #tpu.memory_space<smem>>, %arg2: memref<2x32x128xf32, #tpu.memory_space<vmem>>, %arg3: memref<2x32x128xf32, #tpu.memory_space<vmem>>, %arg4: memref<2x41x1xf32, #tpu.memory_space<vmem>>) attributes {dimension_semantics = [#tpu.dimension_semantics<parallel>], iteration_bounds = array<i64: 1>, scalar_prefetch = 1 : i64, scratch_operands = 1 : i64, tpu.core_type = #tpu.core_type<tc>, window_params = [{transform_indices = @transform_0, window_bounds = array<i64: 2, 32, 128>}, {transform_indices = @transform_1, window_bounds = array<i64: 2, 32, 128>}]} {
    %c0 = arith.constant 0 : index
    %c0_0 = arith.constant 0 : index
    %c0_1 = arith.constant 0 : index
    %0 = vector.load %arg2[%c0, %c0_0, %c0_1] : memref<2x32x128xf32, #tpu.memory_space<vmem>>, vector<2x32x128xf32>
    %cst = arith.constant dense<0.000000e+00> : vector<2x32xf32>
    %1 = vector.multi_reduction <add>, %0, %cst [2] : vector<2x32x128xf32> to vector<2x32xf32>
    %2 = vector.shape_cast %1 : vector<2x32xf32> to vector<2x32x1xf32>
    %cst_2 = arith.constant 0.000000e+00 : f32
    %3 = vector.broadcast %cst_2 : f32 to vector<2x41x1xf32>
    %c0_3 = arith.constant 0 : index
    %c0_4 = arith.constant 0 : index
    %c0_5 = arith.constant 0 : index
    %4 = vector.load %arg4[%c0_3, %c0_4, %c0_5] : memref<2x41x1xf32, #tpu.memory_space<vmem>>, vector<2x41x1xf32>
    tpu.vector_store %arg4[%c0_3, %c0_4, %c0_5], %3 {strides = array<i32>} : memref<2x41x1xf32, #tpu.memory_space<vmem>>, vector<2x41x1xf32>,
    %c0_6 = arith.constant 0 : index
    %c8 = arith.constant 8 : index
    %c0_7 = arith.constant 0 : index
    %5 = vector.load %arg4[%c0_6, %c8, %c0_7] : memref<2x41x1xf32, #tpu.memory_space<vmem>>, vector<2x32x1xf32>
    tpu.vector_store %arg4[%c0_6, %c8, %c0_7], %2 {strides = array<i32>} : memref<2x41x1xf32, #tpu.memory_space<vmem>>, vector<2x32x1xf32>,
    %c0_8 = arith.constant 0 : index
    %6 = memref.load %arg1[%c0_8] : memref<3xf32, #tpu.memory_space<smem>>
    %c0_9 = arith.constant 0 : index
    %c7 = arith.constant 7 : index
    %c0_10 = arith.constant 0 : index
    %7 = vector.load %arg4[%c0_9, %c7, %c0_10] : memref<2x41x1xf32, #tpu.memory_space<vmem>>, vector<2x32x1xf32>
    %8 = vector.broadcast %6 : f32 to vector<2x32x1xf32>
    %9 = arith.mulf %8, %7 : vector<2x32x1xf32>
    %c1 = arith.constant 1 : index
    %10 = memref.load %arg1[%c1] : memref<3xf32, #tpu.memory_space<smem>>
    %c0_11 = arith.constant 0 : index
    %c8_12 = arith.constant 8 : index
    %c0_13 = arith.constant 0 : index
    %11 = vector.load %arg4[%c0_11, %c8_12, %c0_13] : memref<2x41x1xf32, #tpu.memory_space<vmem>>, vector<2x32x1xf32>
    %12 = vector.broadcast %10 : f32 to vector<2x32x1xf32>
    %13 = arith.mulf %12, %11 : vector<2x32x1xf32>
    %14 = arith.addf %9, %13 : vector<2x32x1xf32>
    %c2 = arith.constant 2 : index
    %15 = memref.load %arg1[%c2] : memref<3xf32, #tpu.memory_space<smem>>
    %c0_14 = arith.constant 0 : index
    %c9 = arith.constant 9 : index
    %c0_15 = arith.constant 0 : index
    %16 = vector.load %arg4[%c0_14, %c9, %c0_15] : memref<2x41x1xf32, #tpu.memory_space<vmem>>, vector<2x32x1xf32>
    %17 = vector.broadcast %15 : f32 to vector<2x32x1xf32>
    %18 = arith.mulf %17, %16 : vector<2x32x1xf32>
    %19 = arith.addf %14, %18 : vector<2x32x1xf32>
    %20 = arith.negf %19 : vector<2x32x1xf32>
    %21 = math.exp %20 : vector<2x32x1xf32>
    %cst_16 = arith.constant 1.000000e+00 : f32
    %22 = vector.broadcast %cst_16 : f32 to vector<2x32x1xf32>
    %23 = arith.addf %22, %21 : vector<2x32x1xf32>
    %24 = arith.divf %22, %23 : vector<2x32x1xf32>
    %25 = vector.broadcast %24 : vector<2x32x1xf32> to vector<2x32x128xf32>
    %26 = arith.mulf %0, %25 : vector<2x32x128xf32>
    %c0_17 = arith.constant 0 : index
    %c0_18 = arith.constant 0 : index
    %c0_19 = arith.constant 0 : index
    %27 = vector.load %arg3[%c0_17, %c0_18, %c0_19] : memref<2x32x128xf32, #tpu.memory_space<vmem>>, vector<2x32x128xf32>
    tpu.vector_store %arg3[%c0_17, %c0_18, %c0_19], %26 {strides = array<i32>} : memref<2x32x128xf32, #tpu.memory_space<vmem>>, vector<2x32x128xf32>,
    return
  }
  func.func @transform_0(%arg0: i32, %arg1: memref<3xf32, #tpu.memory_space<smem>>) -> (i32, i32, i32) {
    %c0_i32 = arith.constant 0 : i32
    %c0_i32_0 = arith.constant 0 : i32
    %c0_i32_1 = arith.constant 0 : i32
    return %arg0, %c0_i32, %c0_i32_0 : i32, i32, i32
  }
  func.func @transform_1(%arg0: i32, %arg1: memref<3xf32, #tpu.memory_space<smem>>) -> (i32, i32, i32) {
    %c0_i32 = arith.constant 0 : i32
    %c0_i32_0 = arith.constant 0 : i32
    %c0_i32_1 = arith.constant 0 : i32
    return %arg0, %c0_i32, %c0_i32_0 : i32, i32, i32
  }
}

</mosaic_0001>

<llo_original>
// kernel: tpu_custom_call.1
$region0: #{tpu_custom_call.1}
  #allocation0 [shape = 'u32[]', space=smem, size = 0x4, offset = 0x4, fixed_abs, tag = 'smem constant byte address 0x4 - core index']
  #allocation1 [shape = 'u32[144,128]{1,0:T(1,128)}', space=vmem, size = 0x12000, scoped, tag = 'internal scratch']
  #allocation2 [shape = 'f32[2,41,1]{2,1,0:T(8,128)}', space=vmem, size = 0xc000, scoped, tag = 'scratch operand']
  #allocation3 [shape = 's32[1]{0}', space=sflag, size = 0x4, scoped, tag = 'scoped memory for tpu_custom_call.1']
  #allocation4 [shape = 'u8[512]{0}', space=smem, size = 0x200, scoped, tag = 'prefetched SMEM operand 0']
  %s0 = inlined_call_operand.hbm [shape: f32[3], index: 0, kind: input, shape index: {}]
  %s1 = inlined_call_operand.hbm [shape: f32[2,32,128], index: 1, kind: input, shape index: {}]
  %s2 = inlined_call_operand.hbm [shape: f32[2,32,128], index: 2, kind: output, shape index: {}]
  %s3 = sld [smem:[#allocation0]]
  $region18: #{tpu_custom_call.1} parent=0
    _
  %s5 = ssub.s32 1, %s3
  %s6 = scalar_select 0, %s5, %s3
  %8 = dma.hbm_to_smem %s0, 16, [#allocation4], [#allocation3]
  %9 = dma.done [#allocation3], 16
  %10 = sfence
  $region1: #{tpu_custom_call.1} parent=0
    #allocation5 [shape = 'u8[32768]{0}', space=vmem, size = 0x8000, scoped, tag = 'input window, operand 1, single buffered']
    #allocation6 [shape = 's32[1]{0}', space=sflag, size = 0x4, scoped, tag = 'scoped memory for tpu_custom_call.1']
    #allocation7 [shape = 's32[1]{0}', space=sflag, size = 0x4, scoped, tag = 'scoped memory for tpu_custom_call.1']
    #allocation8 [shape = 'u8[32768]{0}', space=vmem, size = 0x8000, scoped, tag = 'output window, operand 0, single buffered']
    %11 = vsyncpa [#allocation6], 0
    %12 = vsyncpa [#allocation7], 0
    // Predicated region
    $region2: #{tpu_custom_call.1} parent=1 // pred_check
      _
    $region3: #{tpu_custom_call.1} parent=1 // pred_check_branch
      %14 = sbr.rel (0) target = $region5
    $region4: #{tpu_custom_call.1} parent=1 // pred_region
      %s16 = ssub.s32 1024, 1024
      %17 = vsyncadd [#allocation6], %s16
      %s18 = sshll.u32 [#allocation5], 4
      %s19 = int_to_ptr.vmem [resolvable:$true] %s18
      %24 = dma.hbm_to_vmem [thread:$0]  %s1, 1024, %s19, [#allocation6], 128, 128, 8
    $region5: #{tpu_custom_call.1} parent=1 // pred_fallthru
      _
    // Predicated region
    $region6: #{tpu_custom_call.1} parent=1 // pred_check
      _
    $region7: #{tpu_custom_call.1} parent=1 // pred_check_branch
      %26 = sbr.rel (0) target = $region9
    $region8: #{tpu_custom_call.1} parent=1 // pred_region
      %27 = dma.done [#allocation6], 1024
    $region9: #{tpu_custom_call.1} parent=1 // pred_fallthru
      _
    %v28 = vld [vmem:[#allocation5] sm:$0xff]
    %v29 = vld [vmem:[#allocation5 + $0x8] sm:$0xff]
    %v30 = vld [vmem:[#allocation5 + $0x10] sm:$0xff]
    %v31 = vld [vmem:[#allocation5 + $0x18] sm:$0xff]
    %v32 = vld [vmem:[#allocation5 + $0x20] sm:$0xff]
    %v33 = vld [vmem:[#allocation5 + $0x28] sm:$0xff]
    %v34 = vld [vmem:[#allocation5 + $0x30] sm:$0xff]
    %v35 = vld [vmem:[#allocation5 + $0x38] sm:$0xff]
    %36 = vadd.xlane.f32.xlu0 %v28
    %v37 = vpop.xlane.xlu0 %36
    %38 = vadd.xlane.f32.xlu0 %v29
    %v39 = vpop.xlane.xlu0 %38
    %40 = vadd.xlane.f32.xlu0 %v30
    %v41 = vpop.xlane.xlu0 %40
    %42 = vadd.xlane.f32.xlu0 %v31
    %v43 = vpop.xlane.xlu0 %42
    %44 = vadd.xlane.f32.xlu0 %v32
    %v45 = vpop.xlane.xlu0 %44
    %46 = vadd.xlane.f32.xlu0 %v33
    %v47 = vpop.xlane.xlu0 %46
    %48 = vadd.xlane.f32.xlu0 %v34
    %v49 = vpop.xlane.xlu0 %48
    %50 = vadd.xlane.f32.xlu0 %v35
    %v51 = vpop.xlane.xlu0 %50
    %vm52 = vcmask 7168
    %53 = vst.msk [vmem:[#allocation2] sm:$0xff] %vm52, 0.0
    %54 = vst.msk [vmem:[#allocation2 + $0x8] sm:$0xff] %vm52, 0.0
    %55 = vst.msk [vmem:[#allocation2 + $0x10] sm:$0xff] %vm52, 0.0
    %56 = vst.msk [vmem:[#allocation2 + $0x18] sm:$0xff] %vm52, 0.0
    %57 = vst.msk [vmem:[#allocation2 + $0x20] sm:$0xff] %vm52, 0.0
    %vm58 = vcmask 0
    %59 = vst.msk [vmem:[#allocation2 + $0x28] sm:$0x1] %vm58, 0.0
    %60 = vst.msk [vmem:[#allocation2 + $0x30] sm:$0xff] %vm52, 0.0
    %61 = vst.msk [vmem:[#allocation2 + $0x38] sm:$0xff] %vm52, 0.0
    %62 = vst.msk [vmem:[#allocation2 + $0x40] sm:$0xff] %vm52, 0.0
    %63 = vst.msk [vmem:[#allocation2 + $0x48] sm:$0xff] %vm52, 0.0
    %64 = vst.msk [vmem:[#allocation2 + $0x50] sm:$0xff] %vm52, 0.0
    %65 = vst.msk [vmem:[#allocation2 + $0x58] sm:$0x1] %vm58, 0.0
    %66 = vst.msk [vmem:[#allocation2 + $0x8] sm:$0xff] %vm52, %v37
    %67 = vst.msk [vmem:[#allocation2 + $0x10] sm:$0xff] %vm52, %v39
    %68 = vst.msk [vmem:[#allocation2 + $0x18] sm:$0xff] %vm52, %v41
    %69 = vst.msk [vmem:[#allocation2 + $0x20] sm:$0xff] %vm52, %v43
    %70 = vst.msk [vmem:[#allocation2 + $0x38] sm:$0xff] %vm52, %v45
    %71 = vst.msk [vmem:[#allocation2 + $0x40] sm:$0xff] %vm52, %v47
    %72 = vst.msk [vmem:[#allocation2 + $0x48] sm:$0xff] %vm52, %v49
    %73 = vst.msk [vmem:[#allocation2 + $0x50] sm:$0xff] %vm52, %v51
    %s74 = sld [smem:[#allocation4]]
    %v75 = vld [vmem:[#allocation2 + $0x7] sm:$0xff]
    %v76 = vld [vmem:[#allocation2 + $0xf] sm:$0xff]
    %v77 = vld [vmem:[#allocation2 + $0x17] sm:$0xff]
    %v78 = vld [vmem:[#allocation2 + $0x1f] sm:$0xff]
    %v79 = vld [vmem:[#allocation2 + $0x37] sm:$0xff]
    %v80 = vld [vmem:[#allocation2 + $0x3f] sm:$0xff]
    %v81 = vld [vmem:[#allocation2 + $0x47] sm:$0xff]
    %v82 = vld [vmem:[#allocation2 + $0x4f] sm:$0xff]
    %v83 = vstv %s74
    %v84 = vmul.f32 %v83, %v75
    %v85 = vmul.f32 %v83, %v76
    %v86 = vmul.f32 %v83, %v77
    %v87 = vmul.f32 %v83, %v78
    %v88 = vmul.f32 %v83, %v79
    %v89 = vmul.f32 %v83, %v80
    %v90 = vmul.f32 %v83, %v81
    %v91 = vmul.f32 %v83, %v82
    %s92 = sld [smem:[#allocation4 + $0x1]]
    %v93 = vld [vmem:[#allocation2 + $0x8] sm:$0xff]
    %v94 = vld [vmem:[#allocation2 + $0x10] sm:$0xff]
    %v95 = vld [vmem:[#allocation2 + $0x18] sm:$0xff]
    %v96 = vld [vmem:[#allocation2 + $0x20] sm:$0xff]
    %v97 = vld [vmem:[#allocation2 + $0x38] sm:$0xff]
    %v98 = vld [vmem:[#allocation2 + $0x40] sm:$0xff]
    %v99 = vld [vmem:[#allocation2 + $0x48] sm:$0xff]
    %v100 = vld [vmem:[#allocation2 + $0x50] sm:$0xff]
    %v101 = vstv %s92
    %v102 = vmul.f32 %v101, %v93
    %v103 = vmul.f32 %v101, %v94
    %v104 = vmul.f32 %v101, %v95
    %v105 = vmul.f32 %v101, %v96
    %v106 = vmul.f32 %v101, %v97
    %v107 = vmul.f32 %v101, %v98
    %v108 = vmul.f32 %v101, %v99
    %v109 = vmul.f32 %v101, %v100
    %v110 = vadd.f32 %v84, %v102
    %v111 = vadd.f32 %v85, %v103
    %v112 = vadd.f32 %v86, %v104
    %v113 = vadd.f32 %v87, %v105
    %v114 = vadd.f32 %v88, %v106
    %v115 = vadd.f32 %v89, %v107
    %v116 = vadd.f32 %v90, %v108
    %v117 = vadd.f32 %v91, %v109
    %s118 = sld [smem:[#allocation4 + $0x2]]
    %v119 = vld [vmem:[#allocation2 + $0x9] sm:$0xff]
    %v120 = vld [vmem:[#allocation2 + $0x11] sm:$0xff]
    %v121 = vld [vmem:[#allocation2 + $0x19] sm:$0xff]
    %v122 = vld [vmem:[#allocation2 + $0x21] sm:$0xff]
    %v123 = vld [vmem:[#allocation2 + $0x39] sm:$0xff]
    %v124 = vld [vmem:[#allocation2 + $0x41] sm:$0xff]
    %v125 = vld [vmem:[#allocation2 + $0x49] sm:$0xff]
    %v126 = vld [vmem:[#allocation2 + $0x51] sm:$0xff]
    %v127 = vstv %s118
    %v128 = vmul.f32 %v127, %v119
    %v129 = vmul.f32 %v127, %v120
    %v130 = vmul.f32 %v127, %v121
    %v131 = vmul.f32 %v127, %v122
    %v132 = vmul.f32 %v127, %v123
    %v133 = vmul.f32 %v127, %v124
    %v134 = vmul.f32 %v127, %v125
    %v135 = vmul.f32 %v127, %v126
    %v136 = vadd.f32 %v110, %v128
    %v137 = vadd.f32 %v111, %v129
    %v138 = vadd.f32 %v112, %v130
    %v139 = vadd.f32 %v113, %v131
    %v140 = vadd.f32 %v114, %v132
    %v141 = vadd.f32 %v115, %v133
    %v142 = vadd.f32 %v116, %v134
    %v143 = vadd.f32 %v117, %v135
    %v144 = vxor.u32 %v136, 2147483648
    %v145 = vxor.u32 %v137, 2147483648
    %v146 = vxor.u32 %v138, 2147483648
    %v147 = vxor.u32 %v139, 2147483648
    %v148 = vxor.u32 %v140, 2147483648
    %v149 = vxor.u32 %v141, 2147483648
    %v150 = vxor.u32 %v142, 2147483648
    %v151 = vxor.u32 %v143, 2147483648
    %v152 = vmul.f32 %v144, 1.442695
    %v153 = vpow.pop %v152
    %v154 = vmul.f32 %v145, 1.442695
    %v155 = vpow.pop %v154
    %v156 = vmul.f32 %v146, 1.442695
    %v157 = vpow.pop %v156
    %v158 = vmul.f32 %v147, 1.442695
    %v159 = vpow.pop %v158
    %v160 = vmul.f32 %v148, 1.442695
    %v161 = vpow.pop %v160
    %v162 = vmul.f32 %v149, 1.442695
    %v163 = vpow.pop %v162
    %v164 = vmul.f32 %v150, 1.442695
    %v165 = vpow.pop %v164
    %v166 = vmul.f32 %v151, 1.442695
    %v167 = vpow.pop %v166
    %v168 = vadd.f32 %v153, 1.0
    %v169 = vadd.f32 %v155, 1.0
    %v170 = vadd.f32 %v157, 1.0
    %v171 = vadd.f32 %v159, 1.0
    %v172 = vadd.f32 %v161, 1.0
    %v173 = vadd.f32 %v163, 1.0
    %v174 = vadd.f32 %v165, 1.0
    %v175 = vadd.f32 %v167, 1.0
    %v176 = vrcp.pop %v168
    %v177 = vmul.f32 1.0, %v176
    %v178 = vrcp.pop %v169
    %v179 = vmul.f32 1.0, %v178
    %v180 = vrcp.pop %v170
    %v181 = vmul.f32 1.0, %v180
    %v182 = vrcp.pop %v171
    %v183 = vmul.f32 1.0, %v182
    %v184 = vrcp.pop %v172
    %v185 = vmul.f32 1.0, %v184
    %v186 = vrcp.pop %v173
    %v187 = vmul.f32 1.0, %v186
    %v188 = vrcp.pop %v174
    %v189 = vmul.f32 1.0, %v188
    %v190 = vrcp.pop %v175
    %v191 = vmul.f32 1.0, %v190
    %193 = vset.pattern.permute.xlu0 0
    %194 = vperm.xlu0 %193, %v177
    %v195 = vpop.permute.xlu0 %194
    %198 = vset.pattern.permute.xlu0 0
    %199 = vperm.xlu0 %198, %v179
    %v200 = vpop.permute.xlu0 %199
    %203 = vset.pattern.permute.xlu0 0
    %204 = vperm.xlu0 %203, %v181
    %v205 = vpop.permute.xlu0 %204
    %208 = vset.pattern.permute.xlu0 0
    %209 = vperm.xlu0 %208, %v183
    %v210 = vpop.permute.xlu0 %209
    %213 = vset.pattern.permute.xlu0 0
    %214 = vperm.xlu0 %213, %v185
    %v215 = vpop.permute.xlu0 %214
    %218 = vset.pattern.permute.xlu0 0
    %219 = vperm.xlu0 %218, %v187
    %v220 = vpop.permute.xlu0 %219
    %223 = vset.pattern.permute.xlu0 0
    %224 = vperm.xlu0 %223, %v189
    %v225 = vpop.permute.xlu0 %224
    %228 = vset.pattern.permute.xlu0 0
    %229 = vperm.xlu0 %228, %v191
    %v230 = vpop.permute.xlu0 %229
    %v232 = vmul.f32 %v28, %v195
    %v233 = vmul.f32 %v29, %v200
    %v234 = vmul.f32 %v30, %v205
    %v235 = vmul.f32 %v31, %v210
    %v236 = vmul.f32 %v32, %v215
    %v237 = vmul.f32 %v33, %v220
    %v238 = vmul.f32 %v34, %v225
    %v239 = vmul.f32 %v35, %v230
    %240 = vst [vmem:[#allocation8] sm:$0xff] %v232
    %241 = vst [vmem:[#allocation8 + $0x8] sm:$0xff] %v233
    %242 = vst [vmem:[#allocation8 + $0x10] sm:$0xff] %v234
    %243 = vst [vmem:[#allocation8 + $0x18] sm:$0xff] %v235
    %244 = vst [vmem:[#allocation8 + $0x20] sm:$0xff] %v236
    %245 = vst [vmem:[#allocation8 + $0x28] sm:$0xff] %v237
    %246 = vst [vmem:[#allocation8 + $0x30] sm:$0xff] %v238
    %247 = vst [vmem:[#allocation8 + $0x38] sm:$0xff] %v239
    // Predicated region
    $region10: #{tpu_custom_call.1} parent=1 // pred_check
      _
    $region11: #{tpu_custom_call.1} parent=1 // pred_check_branch
      %249 = sbr.rel (0) target = $region13
    $region12: #{tpu_custom_call.1} parent=1 // pred_region
      %s251 = ssub.s32 1024, 1024
      %252 = vsyncadd [#allocation7], %s251
      %s253 = sshll.u32 [#allocation8], 4
      %s254 = int_to_ptr.vmem [resolvable:$true] %s253
      %259 = dma.vmem_to_hbm [thread:$0]  %s254, 1024, %s2, [#allocation7], 128, 128, 8
    $region13: #{tpu_custom_call.1} parent=1 // pred_fallthru
      _
    // Predicated region
    $region14: #{tpu_custom_call.1} parent=1 // pred_check
      _
    $region15: #{tpu_custom_call.1} parent=1 // pred_check_branch
      %261 = sbr.rel (0) target = $region17
    $region16: #{tpu_custom_call.1} parent=1 // pred_region
      %262 = dma.done [#allocation7], 1024
    $region17: #{tpu_custom_call.1} parent=1 // pred_fallthru
      _
    %263 = vsyncpa [#allocation6], 1
    %264 = vsyncpa [#allocation7], 1

</llo_original>
